<compile_context>
chip_gen: v7x
topology: tpu7x:2x2x1
jax: 0.10.0
libtpu: 0.0.40
codegen_flags: <defaults>
</compile_context>

<pallas_src>
import functools

import jax
import jax.numpy as jnp
from jax.experimental import pallas as pl
from jax.experimental.pallas import tpu as pltpu


def _round_up(x, m):
    return ((x + m - 1) // m) * m


def _pick_tile(dim, want):
    """Pick (tile, padded_dim) with tile | padded_dim, both 128-aligned.

    Never falls below 512-wide tiles for large dims (128-wide tiles reach only
    ~29% of HBM roofline vs ~85% at 512); small dims get one full-extent tile.
    """
    want = max(512, int(want))
    d128 = _round_up(dim, 128)
    if d128 <= want:
        return d128, d128                       # single full-extent tile
    best_tile, best_pad = None, None
    for t in sorted({512, want}, reverse=True):  # prefer larger tile on ties
        padded = _round_up(dim, t)
        if best_pad is None or padded < best_pad:
            best_tile, best_pad = t, padded
    return best_tile, best_pad


def _upsampling_kernel_resident_x(x_ref, ut_ref, o_ref, *, tp):
    # x_ref:  [F_pad, P_pad]  whole input, copied to VMEM once (constant index_map)
    # ut_ref: [TP, TC]        streamed tile of U^T (the HBM-bound operand)
    # o_ref:  [F_pad, TC]     f32 output tile, resident across k -> accumulator
    k = pl.program_id(1)

    @pl.when(k == 0)
    def _():
        o_ref[...] = jnp.zeros_like(o_ref)

    off = pl.multiple_of(k * tp, tp)
    o_ref[...] += jnp.dot(x_ref[:, pl.ds(off, tp)], ut_ref[...],
                          preferred_element_type=jnp.float32)


def _upsampling_kernel_blocked_x(x_ref, ut_ref, o_ref):
    # Fallback for huge parent dims: X streamed in (F_pad, TP) blocks.
    k = pl.program_id(1)

    @pl.when(k == 0)
    def _():
        o_ref[...] = jnp.zeros_like(o_ref)

    o_ref[...] += jnp.dot(x_ref[...], ut_ref[...],
                          preferred_element_type=jnp.float32)


class UpsamplingPallas:
    """Pallas-TPU port of graph_deep_decoder's Upsampling: forward(x) = x @ U^T."""

    _SMALL_U_BYTES = 256 * 1024          # below this, XLA's fused matmul wins
    _X_RESIDENT_BYTES = 8 * 1024 * 1024  # keep X fully VMEM-resident below this

    def __init__(self, U, *, tile_c=1024, tile_p=1024):
        U = jnp.asarray(U, jnp.float32)
        assert U.ndim == 2
        self.child_size, self.parent_size = int(U.shape[0]), int(U.shape[1])
        self.U_T = U.T                                   # [P, C], for fast path

        self._small = (self.child_size * self.parent_size * 4) < self._SMALL_U_BYTES
        if self._small:
            self.UTp = None
            return

        # ---- one-time (init-path) transpose + zero-pad of U^T ----
        C, P = self.child_size, self.parent_size
        self.TC, self.C_pad = _pick_tile(C, tile_c)
        self.TP, self.P_pad = _pick_tile(P, tile_p)
        # v7x megacore: make sure the parallel (child) axis has >= 2 tiles.
        if self.C_pad // self.TC == 1 and self.C_pad % 256 == 0:
            self.TC = self.C_pad // 2
        self.UTp = (jnp.zeros((self.P_pad, self.C_pad), jnp.float32)
                    .at[:P, :C].set(self.U_T))

    def __call__(self, x):
        assert x.ndim == 3 and x.shape[0] == 1, 'Number of input samples must be 1'
        assert x.shape[2] == self.parent_size, (x.shape, self.parent_size)

        if self._small:
            # Tiny U: launch + padding overhead dominates -> plain matmul.
            return jnp.matmul(x.astype(jnp.float32), self.U_T)

        F = int(x.shape[1])
        C, P = self.child_size, self.parent_size
        TC, TP, C_pad, P_pad = self.TC, self.TP, self.C_pad, self.P_pad

        F_pad = _round_up(F, 8)          # f32 sublane minimum (bf16 would need 16)
        Xp = (jnp.zeros((F_pad, P_pad), jnp.float32)
              .at[:F, :P].set(x[0].astype(jnp.float32)))

        x_resident = 2 * F_pad * P_pad * 4 <= self._X_RESIDENT_BYTES
        if x_resident:
            kernel = functools.partial(_upsampling_kernel_resident_x, tp=TP)
            x_spec = pl.BlockSpec((F_pad, P_pad), lambda j, k: (0, 0))
        else:
            kernel = _upsampling_kernel_blocked_x
            x_spec = pl.BlockSpec((F_pad, TP), lambda j, k: (0, k))

        # VMEM budget: X buffers + double-buffered U^T tile + output tile; keep
        # well below v7x's 64 MiB physical VMEM per TensorCore.
        vmem_bytes = 4 * (2 * F_pad * (P_pad if x_resident else TP)
                          + 2 * TP * TC
                          + 2 * F_pad * TC)
        vmem_limit = int(min(32 * 1024 * 1024,
                             max(4 * 1024 * 1024, 2 * vmem_bytes)))

        grid = (C_pad // TC, P_pad // TP)   # reduction (parent) axis last

        out_pad = pl.pallas_call(
            kernel,
            out_shape=jax.ShapeDtypeStruct((F_pad, C_pad), jnp.float32),
            grid_spec=pltpu.PrefetchScalarGridSpec(
                num_scalar_prefetch=0,
                grid=grid,
                in_specs=[
                    x_spec,
                    # NOTE: pipeline_mode=pl.Buffered(3) here could hide DMA
                    # jitter further; default double-buffering kept for portability.
                    pl.BlockSpec((TP, TC), lambda j, k: (k, j)),
                ],
                out_specs=pl.BlockSpec((F_pad, TC), lambda j, k: (0, j)),
            ),
            compiler_params=pltpu.CompilerParams(
                dimension_semantics=("parallel", "arbitrary"),
                vmem_limit_bytes=vmem_limit,
            ),
        )(Xp, self.UTp)

        return out_pad[:F, :C].reshape(1, F, C)


def _reference_forward(x, U):
    return jnp.matmul(x, jnp.asarray(U, jnp.float32).T)


if __name__ == "__main__":
    key = jax.random.PRNGKey(0)
    k_x, k_u, k_x2, k_u2 = jax.random.split(key, 4)

    # Case 1: large enough that the Pallas kernel path runs (U = 512 KiB).
    F, parent_size, child_size = 4, 256, 512
    x = jax.random.normal(k_x, (1, F, parent_size), jnp.float32)
    U = jax.random.normal(k_u, (child_size, parent_size), jnp.float32)

    layer = UpsamplingPallas(U)
    assert not layer._small, "demo must exercise the Pallas path"
    out = layer(x)
    jax.block_until_ready(out)

    ref = _reference_forward(x, U)
    assert out.shape == (1, F, child_size), out.shape
    assert jnp.allclose(out, ref, atol=1e-4, rtol=1e-4)

    # Case 2: tiny U exercises the small-problem fast path.
    F2, parent2, child2 = 4, 16, 32
    x2 = jax.random.normal(k_x2, (1, F2, parent2), jnp.float32)
    U2 = jax.random.normal(k_u2, (child2, parent2), jnp.float32)
    layer2 = UpsamplingPallas(U2)
    out2 = layer2(x2)
    jax.block_until_ready(out2)
    assert out2.shape == (1, F2, child2), out2.shape
    assert jnp.allclose(out2, _reference_forward(x2, U2), atol=1e-4, rtol=1e-4)

    print("KERNEL_OK")
</pallas_src>

<mosaic_0001>
module attributes {stable_mosaic.version = 11 : i64} {
  func.func @_upsampling_kernel_resident_x(%arg0: i32, %arg1: i32, %arg2: memref<8x256xf32, #tpu.memory_space<vmem>>, %arg3: memref<256x256xf32, #tpu.memory_space<vmem>>, %arg4: memref<8x256xf32, #tpu.memory_space<vmem>>) attributes {dimension_semantics = [#tpu.dimension_semantics<parallel>, #tpu.dimension_semantics<arbitrary>], iteration_bounds = array<i64: 2, 1>, scalar_prefetch = 0 : i64, scratch_operands = 0 : i64, tpu.core_type = #tpu.core_type<tc>, window_params = [{pipeline_mode = #tpu.pipeline_mode<synchronous>, transform_indices = @transform_0, window_bounds = array<i64: 8, 256>}, {transform_indices = @transform_1, window_bounds = array<i64: 256, 256>}, {transform_indices = @transform_2, window_bounds = array<i64: 8, 256>}]} {
    %c0_i32 = arith.constant 0 : i32
    %0 = arith.cmpi eq, %arg1, %c0_i32 : i32
    %1 = arith.extui %0 : i1 to i32
    %c0_i32_0 = arith.constant 0 : i32
    %2 = arith.cmpi ne, %1, %c0_i32_0 : i32
    scf.if %2 {
      %cst_7 = arith.constant 0.000000e+00 : f32
      %12 = vector.broadcast %cst_7 : f32 to vector<8x256xf32>
      %c0_8 = arith.constant 0 : index
      %c0_9 = arith.constant 0 : index
      %13 = vector.load %arg4[%c0_8, %c0_9] : memref<8x256xf32, #tpu.memory_space<vmem>>, vector<8x256xf32>
      tpu.vector_store %arg4[%c0_8, %c0_9], %12 {strides = array<i32>} : memref<8x256xf32, #tpu.memory_space<vmem>>, vector<8x256xf32>,
    } else {
    }
    %c256_i32 = arith.constant 256 : i32
    %3 = arith.muli %arg1, %c256_i32 : i32
    %4 = tpu.assume_multiple %3, 256 : i32
    %c0 = arith.constant 0 : index
    %c0_1 = arith.constant 0 : index
    %5 = vector.load %arg4[%c0, %c0_1] : memref<8x256xf32, #tpu.memory_space<vmem>>, vector<8x256xf32>
    %c0_2 = arith.constant 0 : index
    %6 = arith.index_cast %4 : i32 to index
    %7 = vector.load %arg2[%c0_2, %6] : memref<8x256xf32, #tpu.memory_space<vmem>>, vector<8x256xf32>
    %c0_3 = arith.constant 0 : index
    %c0_4 = arith.constant 0 : index
    %8 = vector.load %arg3[%c0_3, %c0_4] : memref<256x256xf32, #tpu.memory_space<vmem>>, vector<256x256xf32>
    %cst = arith.constant dense<0.000000e+00> : vector<8x256xf32>
    %9 = tpu.matmul %7, %8, %cst {dimension_numbers = #tpu.dot_dimension_numbers<[1], [0], [0], [1], [0, 0, 1, 1], [], []>} : vector<8x256xf32>, vector<256x256xf32>, vector<8x256xf32> -> vector<8x256xf32>
    %10 = arith.addf %5, %9 : vector<8x256xf32>
    %c0_5 = arith.constant 0 : index
    %c0_6 = arith.constant 0 : index
    %11 = vector.load %arg4[%c0_5, %c0_6] : memref<8x256xf32, #tpu.memory_space<vmem>>, vector<8x256xf32>
    tpu.vector_store %arg4[%c0_5, %c0_6], %10 {strides = array<i32>} : memref<8x256xf32, #tpu.memory_space<vmem>>, vector<8x256xf32>,
    return
  }
  func.func @transform_0(%arg0: i32, %arg1: i32) -> (i32, i32) {
    %c0_i32 = arith.constant 0 : i32
    %c0_i32_0 = arith.constant 0 : i32
    %c0_i32_1 = arith.constant 0 : i32
    return %c0_i32, %c0_i32_0 : i32, i32
  }
  func.func @transform_1(%arg0: i32, %arg1: i32) -> (i32, i32) {
    %c0_i32 = arith.constant 0 : i32
    return %arg1, %arg0 : i32, i32
  }
  func.func @transform_2(%arg0: i32, %arg1: i32) -> (i32, i32) {
    %c0_i32 = arith.constant 0 : i32
    %c0_i32_0 = arith.constant 0 : i32
    return %c0_i32, %arg0 : i32, i32
  }
}

</mosaic_0001>

<llo_original>
// kernel: tpu_custom_call.1
$region0: #{tpu_custom_call.1}
  #allocation0 [shape = 'u32[]', space=smem, size = 0x4, offset = 0x4, fixed_abs, tag = 'smem constant byte address 0x4 - core index']
  #allocation1 [shape = 'u32[144,128]{1,0:T(1,128)}', space=vmem, size = 0x12000, scoped, tag = 'internal scratch']
  %s0 = inlined_call_operand.hbm [shape: f32[8,256], index: 0, kind: input, shape index: {}]
  %s1 = inlined_call_operand.hbm [shape: f32[256,512], index: 1, kind: input, shape index: {}]
  %s2 = inlined_call_operand.hbm [shape: f32[8,512], index: 2, kind: output, shape index: {}]
  %s3 = sld [smem:[#allocation0]]
  $region53: #{tpu_custom_call.1} parent=0
    _
  %s5 = ssub.s32 1, %s3
  %s6 = scalar_select 0, %s5, %s3
  $region1: #{tpu_custom_call.1} parent=0
    #allocation2 [shape = 'u8[8192]{0}', space=vmem, size = 0x2000, scoped, tag = 'input window, operand 0, single buffered']
    #allocation3 [shape = 's32[2]{0}', space=sflag, size = 0x8, scoped, tag = 'scoped memory for tpu_custom_call.1']
    #allocation4 [shape = 's32[2]{0}', space=sflag, size = 0x8, scoped, tag = 'scoped memory for tpu_custom_call.1']
    #allocation5 [shape = 'u8[524288]{0}', space=vmem, size = 0x80000, scoped, tag = 'input window, operand 1']
    #allocation6 [shape = 's32[2]{0}', space=sflag, size = 0x8, scoped, tag = 'scoped memory for tpu_custom_call.1']
    #allocation7 [shape = 'u8[16384]{0}', space=vmem, size = 0x4000, scoped, tag = 'output window, operand 0']
    %7 = vsyncpa [#allocation3], 0
    %8 = vsyncpa [#allocation6], 0
    %s9 = scalar_lea.sflag [#allocation6], 1
    %10 = vsyncpa %s9, 0
    %11 = vsyncpa [#allocation4], 0
    %s12 = scalar_lea.sflag [#allocation4], 1
    %13 = vsyncpa %s12, 0
    loop: start=0, step=1, limit=4
    $region2: #{tpu_custom_call.1} parent=1 // loop_pre_header
      _
    $region3: #{tpu_custom_call.1} parent=1 // loop_header
      %s15 = sphi 0, %s19
      %p16 = scmp.ge.s32.totalorder %s15, 4
      %s22 = sphi 0, %s34
      %s23 = sphi 0, %s30
      %s24 = sphi 0, %s22
      %s25 = sphi 0, %s23
      %s26 = sphi 0, %s24
      %s27 = sphi 0, %s25
      %s35 = sphi 0, %s35
      %s37 = sphi 0, %s35
      %s38 = sphi 0, %s37
      %s52 = sphi 0, %s38
      %s60 = sphi 0, %s62
      %s63 = sphi 0, %s60
      %s64 = sphi 0, %s63
      %s80 = sphi 0, %s64
      %s86 = sphi 0, %s88
      %s89 = sphi 0, %s86
      %s90 = sphi 0, %s89
      %s106 = sphi 0, %s90
    $region4: #{tpu_custom_call.1} parent=1 // loop_header_branch
      %18 = sbr.rel (%p16) target = $region8
    $region5: #{tpu_custom_call.1} parent=1 // loop_body
      %s20 = ssub.s32 %s15, 1
      %s21 = ssub.s32 %s15, 2
      %s28 = sadd.s32 1, %s23
      %p29 = scmp.ge.s32.totalorder %s28, 1
      %s30 = scalar_select %p29, 0, %s28
      %s31 = sadd.s32 1, %s22
      %s32 = scalar_select %p29, %s31, %s22
      %p33 = scmp.ge.s32.totalorder %s32, 2
      %s34 = scalar_select %p33, 0, %s32
      %s36 = sadd.s32 %s35, 1
      %p39 = scmp.eq.s32.totalorder %s15, 1
      %p40 = scmp.ne.s32.totalorder %s35, %s37
      %p41 = scmp.eq.s32.totalorder %s15, 0
      %p42 = por %p40, %p41
      %p43 = scmp.ne.s32.totalorder %s35, %s37
      %p44 = scmp.eq.s32.totalorder %s20, 1
      %p45 = por %p43, %p44
      %p46 = scmp.ne.s32.totalorder %s37, %s38
      %p47 = scmp.eq.s32.totalorder %s20, 0
      %p48 = por %p46, %p47
      %p49 = scmp.ne.s32.totalorder %s37, %s38
      %p50 = scmp.eq.s32.totalorder %s21, 1
      %p51 = por %p49, %p50
      %p53 = scmp.ne.s32.totalorder %s38, %s52
      %p54 = scmp.eq.s32.totalorder %s21, 0
      %p55 = por %p53, %p54
      %s56 = ssub.s32 %s23, %s30
      %s57 = ssub.s32 %s22, %s34
      %s58 = sor.u32 %s56, %s57
      %p59 = scmp.eq.s32.totalorder %s58, 0
      %s61 = sadd.s32 %s60, 1
      %s62 = scalar_select %p59, %s60, %s61
      %p65 = pneg %p59
      %p66 = scmp.eq.s32.totalorder %s15, 1
      %p67 = por %p65, %p66
      %p68 = scmp.ne.s32.totalorder %s60, %s63
      %p69 = scmp.eq.s32.totalorder %s15, 0
      %p70 = por %p68, %p69
      %p71 = scmp.ne.s32.totalorder %s60, %s63
      %p72 = scmp.eq.s32.totalorder %s20, 1
      %p73 = por %p71, %p72
      %p74 = scmp.ne.s32.totalorder %s63, %s64
      %p75 = scmp.eq.s32.totalorder %s20, 0
      %p76 = por %p74, %p75
      %p77 = scmp.ne.s32.totalorder %s63, %s64
      %p78 = scmp.eq.s32.totalorder %s21, 1
      %p79 = por %p77, %p78
      %p81 = scmp.ne.s32.totalorder %s64, %s80
      %p82 = scmp.eq.s32.totalorder %s21, 0
      %p83 = por %p81, %p82
      %s84 = ssub.s32 %s22, %s34
      %p85 = scmp.eq.s32.totalorder %s84, 0
      %s87 = sadd.s32 %s86, 1
      %s88 = scalar_select %p85, %s86, %s87
      %p91 = pneg %p85
      %p92 = scmp.eq.s32.totalorder %s15, 1
      %p93 = por %p91, %p92
      %p94 = scmp.ne.s32.totalorder %s86, %s89
      %p95 = scmp.eq.s32.totalorder %s15, 0
      %p96 = por %p94, %p95
      %p97 = scmp.ne.s32.totalorder %s86, %s89
      %p98 = scmp.eq.s32.totalorder %s20, 1
      %p99 = por %p97, %p98
      %p100 = scmp.ne.s32.totalorder %s89, %s90
      %p101 = scmp.eq.s32.totalorder %s20, 0
      %p102 = por %p100, %p101
      %p103 = scmp.ne.s32.totalorder %s89, %s90
      %p104 = scmp.eq.s32.totalorder %s21, 1
      %p105 = por %p103, %p104
      %p107 = scmp.ne.s32.totalorder %s90, %s106
      %p108 = scmp.eq.s32.totalorder %s21, 0
      %p109 = por %p107, %p108
      %p110 = scmp.le.s32.totalorder 1, %s15
      %p111 = scmp.lt.s32.totalorder %s15, 3
      %p112 = pnand %p110, %p111
      %p113 = pneg %p112
      // Predicated region
      $region9: #{tpu_custom_call.1} parent=5 // pred_check
        _
      $region10: #{tpu_custom_call.1} parent=5 // pred_check_branch
        %115 = sbr.rel (%p112) target = $region12
      $region11: #{tpu_custom_call.1} parent=5 // pred_region
        %s116 = ssub.s32 %s15, 1
        // Predicated region
        $region13: #{tpu_custom_call.1} parent=11 // pred_check
          %p117 = pneg %p48
        $region14: #{tpu_custom_call.1} parent=11 // pred_check_branch
          %119 = sbr.rel (%p117) target = $region16
        $region15: #{tpu_custom_call.1} parent=11 // pred_region
          %s121 = ssub.s32 256, 256
          %122 = vsyncadd [#allocation3], %s121
          %s124 = sshll.u32 [#allocation2], 4
          %s125 = int_to_ptr.vmem [resolvable:$true] %s124
          %127 = dma.hbm_to_vmem [thread:$0]  %s0, 256, %s125, [#allocation3]
        $region16: #{tpu_custom_call.1} parent=11 // pred_fallthru
          _
      $region12: #{tpu_custom_call.1} parent=5 // pred_fallthru
        _
      %p128 = scmp.lt.s32.totalorder %s15, 2
      // Predicated region
      $region17: #{tpu_custom_call.1} parent=5 // pred_check
        %p129 = pneg %p128
      $region18: #{tpu_custom_call.1} parent=5 // pred_check_branch
        %131 = sbr.rel (%p129) target = $region20
      $region19: #{tpu_custom_call.1} parent=5 // pred_region
        // Predicated region
        $region21: #{tpu_custom_call.1} parent=19 // pred_check
          %p132 = pneg %p70
        $region22: #{tpu_custom_call.1} parent=19 // pred_check_branch
          %134 = sbr.rel (%p132) target = $region24
        $region23: #{tpu_custom_call.1} parent=19 // pred_region
          %s135 = sand.u32 %s60, 1
          %s136 = scalar_lea.sflag [#allocation6], %s135
          %s137 = sand.u32 %s60, 1
          %s138 = smul.addr %s137, 512
          %s139 = scalar_lea.vmem [#allocation5], %s138
          %s140 = smul.u32 32, %s23
          %s141 = smul.u32 2, %s22
          %s143 = ssub.s32 8192, 8192
          %144 = vsyncadd %s136, %s143
          %s145 = smul.addr %s140, 4
          %s146 = sadd.s32 %s141, %s145
          %s147 = smul.addr %s146, 128
          %s148 = scalar_lea.hbm %s1, %s147
          %s149 = sshll.u32 %s139, 4
          %s150 = int_to_ptr.vmem [resolvable:$true] %s149
          %155 = dma.hbm_to_vmem [thread:$0]  %s148, 8192, %s150, %s136, 512, 256, 16
        $region24: #{tpu_custom_call.1} parent=19 // pred_fallthru
          _
      $region20: #{tpu_custom_call.1} parent=5 // pred_fallthru
        _
      %p156 = scmp.le.s32.totalorder 1, %s15
      %p157 = scmp.lt.s32.totalorder %s15, 3
      %p158 = pnand %p156, %p157
      %p159 = pneg %p158
      // Predicated region
      $region25: #{tpu_custom_call.1} parent=5 // pred_check
        _
      $region26: #{tpu_custom_call.1} parent=5 // pred_check_branch
        %161 = sbr.rel (%p158) target = $region28
      $region27: #{tpu_custom_call.1} parent=5 // pred_region
        %s162 = ssub.s32 %s15, 1
        // Predicated region
        $region29: #{tpu_custom_call.1} parent=27 // pred_check
          %p163 = pneg %p48
        $region30: #{tpu_custom_call.1} parent=27 // pred_check_branch
          %165 = sbr.rel (%p163) target = $region32
        $region31: #{tpu_custom_call.1} parent=27 // pred_region
          %166 = dma.done [#allocation3], 256
        $region32: #{tpu_custom_call.1} parent=27 // pred_fallthru
          _
        %s167 = sand.u32 %s63, 1
        %s168 = scalar_lea.sflag [#allocation6], %s167
        %s169 = sand.u32 %s63, 1
        %s170 = smul.addr %s169, 512
        %s171 = scalar_lea.vmem [#allocation5], %s170
        // Predicated region
        $region33: #{tpu_custom_call.1} parent=27 // pred_check
          %p172 = pneg %p76
        $region34: #{tpu_custom_call.1} parent=27 // pred_check_branch
          %174 = sbr.rel (%p172) target = $region36
        $region35: #{tpu_custom_call.1} parent=27 // pred_region
          %175 = dma.done %s168, 8192
        $region36: #{tpu_custom_call.1} parent=27 // pred_fallthru
          _
        %p176 = pneg %p48
        %p177 = pneg %p45
        %s178 = sand.u32 %s63, 1
        %s179 = scalar_lea.sflag [#allocation6], %s178
        %s180 = sand.u32 %s63, 1
        %s181 = smul.addr %s180, 512
        %s182 = scalar_lea.vmem [#allocation5], %s181
        %p183 = pneg %p76
        %p184 = pneg %p73
        %p185 = pneg %p102
        %p186 = pneg %p99
        %s187 = sand.u32 %s89, 1
        %s188 = scalar_lea.sflag [#allocation4], %s187
        %s189 = sand.u32 %s89, 1
        %s190 = smul.addr %s189, 16
        %s191 = scalar_lea.vmem [#allocation7], %s190
        %s192 = smul.u32 32, %s25
        %s193 = smul.u32 2, %s24
        %s194 = smul.u32 2, %s24
        %p195 = scmp.eq.s32.totalorder %s25, 0
        // Predicated region
        $region37: #{tpu_custom_call.1} parent=27 // pred_check
          %p196 = pneg %p195
        $region38: #{tpu_custom_call.1} parent=27 // pred_check_branch
          %198 = sbr.rel (%p196) target = $region40
        $region39: #{tpu_custom_call.1} parent=27 // pred_region
          %199 = vst [vmem:[%s191] sm:$0xff] 0.0
          %200 = vst [vmem:[%s191 + $0x8] sm:$0xff] 0.0
        $region40: #{tpu_custom_call.1} parent=27 // pred_fallthru
          _
        %s201 = smul.u32 %s25, 256
        %v202 = vld [vmem:[%s191] sm:$0xff]
        %v203 = vld [vmem:[%s191 + $0x8] sm:$0xff]
        %s204 = sshra.s32 %s201, 7
        %s205 = sand.u32 %s201, 127
        %s206 = smul.addr %s204, 8
        %s207 = scalar_lea.vmem [#allocation2], %s206
        %v208 = vld [vmem:[%s207] sm:$0xff]
        %v209 = vld [vmem:[%s207 + $0x8] sm:$0xff]
        %v210 = vld [vmem:[%s171] sm:$0xff]
        %v211 = vld [vmem:[%s171 + $0x8] sm:$0xff]
        %v212 = vld [vmem:[%s171 + $0x10] sm:$0xff]
        %v213 = vld [vmem:[%s171 + $0x18] sm:$0xff]
        %v214 = vld [vmem:[%s171 + $0x20] sm:$0xff]
        %v215 = vld [vmem:[%s171 + $0x28] sm:$0xff]
        %v216 = vld [vmem:[%s171 + $0x30] sm:$0xff]
        %v217 = vld [vmem:[%s171 + $0x38] sm:$0xff]
        %v218 = vld [vmem:[%s171 + $0x40] sm:$0xff]
        %v219 = vld [vmem:[%s171 + $0x48] sm:$0xff]
        %v220 = vld [vmem:[%s171 + $0x50] sm:$0xff]
        %v221 = vld [vmem:[%s171 + $0x58] sm:$0xff]
        %v222 = vld [vmem:[%s171 + $0x60] sm:$0xff]
        %v223 = vld [vmem:[%s171 + $0x68] sm:$0xff]
        %v224 = vld [vmem:[%s171 + $0x70] sm:$0xff]
        %v225 = vld [vmem:[%s171 + $0x78] sm:$0xff]
        %v226 = vld [vmem:[%s171 + $0x80] sm:$0xff]
        %v227 = vld [vmem:[%s171 + $0x88] sm:$0xff]
        %v228 = vld [vmem:[%s171 + $0x90] sm:$0xff]
        %v229 = vld [vmem:[%s171 + $0x98] sm:$0xff]
        %v230 = vld [vmem:[%s171 + $0xa0] sm:$0xff]
        %v231 = vld [vmem:[%s171 + $0xa8] sm:$0xff]
        %v232 = vld [vmem:[%s171 + $0xb0] sm:$0xff]
        %v233 = vld [vmem:[%s171 + $0xb8] sm:$0xff]
        %v234 = vld [vmem:[%s171 + $0xc0] sm:$0xff]
        %v235 = vld [vmem:[%s171 + $0xc8] sm:$0xff]
        %v236 = vld [vmem:[%s171 + $0xd0] sm:$0xff]
        %v237 = vld [vmem:[%s171 + $0xd8] sm:$0xff]
        %v238 = vld [vmem:[%s171 + $0xe0] sm:$0xff]
        %v239 = vld [vmem:[%s171 + $0xe8] sm:$0xff]
        %v240 = vld [vmem:[%s171 + $0xf0] sm:$0xff]
        %v241 = vld [vmem:[%s171 + $0xf8] sm:$0xff]
        %v242 = vld [vmem:[%s171 + $0x100] sm:$0xff]
        %v243 = vld [vmem:[%s171 + $0x108] sm:$0xff]
        %v244 = vld [vmem:[%s171 + $0x110] sm:$0xff]
        %v245 = vld [vmem:[%s171 + $0x118] sm:$0xff]
        %v246 = vld [vmem:[%s171 + $0x120] sm:$0xff]
        %v247 = vld [vmem:[%s171 + $0x128] sm:$0xff]
        %v248 = vld [vmem:[%s171 + $0x130] sm:$0xff]
        %v249 = vld [vmem:[%s171 + $0x138] sm:$0xff]
        %v250 = vld [vmem:[%s171 + $0x140] sm:$0xff]
        %v251 = vld [vmem:[%s171 + $0x148] sm:$0xff]
        %v252 = vld [vmem:[%s171 + $0x150] sm:$0xff]
        %v253 = vld [vmem:[%s171 + $0x158] sm:$0xff]
        %v254 = vld [vmem:[%s171 + $0x160] sm:$0xff]
        %v255 = vld [vmem:[%s171 + $0x168] sm:$0xff]
        %v256 = vld [vmem:[%s171 + $0x170] sm:$0xff]
        %v257 = vld [vmem:[%s171 + $0x178] sm:$0xff]
        %v258 = vld [vmem:[%s171 + $0x180] sm:$0xff]
        %v259 = vld [vmem:[%s171 + $0x188] sm:$0xff]
        %v260 = vld [vmem:[%s171 + $0x190] sm:$0xff]
        %v261 = vld [vmem:[%s171 + $0x198] sm:$0xff]
        %v262 = vld [vmem:[%s171 + $0x1a0] sm:$0xff]
        %v263 = vld [vmem:[%s171 + $0x1a8] sm:$0xff]
        %v264 = vld [vmem:[%s171 + $0x1b0] sm:$0xff]
        %v265 = vld [vmem:[%s171 + $0x1b8] sm:$0xff]
        %v266 = vld [vmem:[%s171 + $0x1c0] sm:$0xff]
        %v267 = vld [vmem:[%s171 + $0x1c8] sm:$0xff]
        %v268 = vld [vmem:[%s171 + $0x1d0] sm:$0xff]
        %v269 = vld [vmem:[%s171 + $0x1d8] sm:$0xff]
        %v270 = vld [vmem:[%s171 + $0x1e0] sm:$0xff]
        %v271 = vld [vmem:[%s171 + $0x1e8] sm:$0xff]
        %v272 = vld [vmem:[%s171 + $0x1f0] sm:$0xff]
        %v273 = vld [vmem:[%s171 + $0x1f8] sm:$0xff]
        %274 = vmatprep.subr.mxu0 %v211
        %275 = vmatpush1.msra.mxu0 %v210
        %276 = vmatprep.subr.mxu0 %v213
        %277 = vmatpush1.msra.mxu0 %v212
        %278 = vmatprep.subr.mxu0 %v215
        %279 = vmatpush1.msra.mxu0 %v214
        %280 = vmatprep.subr.mxu0 %v217
        %281 = vmatpush1.msra.mxu0 %v216
        %282 = vmatprep.subr.mxu0 %v219
        %283 = vmatpush1.msra.mxu0 %v218
        %284 = vmatprep.subr.mxu0 %v221
        %285 = vmatpush1.msra.mxu0 %v220
        %286 = vmatprep.subr.mxu0 %v223
        %287 = vmatpush1.msra.mxu0 %v222
        %288 = vmatprep.subr.mxu0 %v225
        %289 = vmatpush1.msra.mxu0 %v224
        %290 = vmatprep.subr.mxu0 %v227
        %291 = vmatpush1.msra.mxu0 %v226
        %292 = vmatprep.subr.mxu0 %v229
        %293 = vmatpush1.msra.mxu0 %v228
        %294 = vmatprep.subr.mxu0 %v231
        %295 = vmatpush1.msra.mxu0 %v230
        %296 = vmatprep.subr.mxu0 %v233
        %297 = vmatpush1.msra.mxu0 %v232
        %298 = vmatprep.subr.mxu0 %v235
        %299 = vmatpush1.msra.mxu0 %v234
        %300 = vmatprep.subr.mxu0 %v237
        %301 = vmatpush1.msra.mxu0 %v236
        %302 = vmatprep.subr.mxu0 %v239
        %303 = vmatpush1.msra.mxu0 %v238
        %304 = vmatprep.subr.mxu0 %v241
        %305 = vmatpush1.msra.mxu0 %v240
        %306 = vmatprep.subr.mxu0 %v243
        %307 = vmatpush1.msra.mxu0 %v242
        %308 = vmatprep.subr.mxu0 %v245
        %309 = vmatpush1.msra.mxu0 %v244
        %310 = vmatprep.subr.mxu0 %v247
        %311 = vmatpush1.msra.mxu0 %v246
        %312 = vmatprep.subr.mxu0 %v249
        %313 = vmatpush1.msra.mxu0 %v248
        %314 = vmatprep.subr.mxu0 %v251
        %315 = vmatpush1.msra.mxu0 %v250
        %316 = vmatprep.subr.mxu0 %v253
        %317 = vmatpush1.msra.mxu0 %v252
        %318 = vmatprep.subr.mxu0 %v255
        %319 = vmatpush1.msra.mxu0 %v254
        %320 = vmatprep.subr.mxu0 %v257
        %321 = vmatpush1.msra.mxu0 %v256
        %322 = vmatprep.subr.mxu0 %v259
        %323 = vmatpush1.msra.mxu0 %v258
        %324 = vmatprep.subr.mxu0 %v261
        %325 = vmatpush1.msra.mxu0 %v260
        %326 = vmatprep.subr.mxu0 %v263
        %327 = vmatpush1.msra.mxu0 %v262
        %328 = vmatprep.subr.mxu0 %v265
        %329 = vmatpush1.msra.mxu0 %v264
        %330 = vmatprep.subr.mxu0 %v267
        %331 = vmatpush1.msra.mxu0 %v266
        %332 = vmatprep.subr.mxu0 %v269
        %333 = vmatpush1.msra.mxu0 %v268
        %334 = vmatprep.subr.mxu0 %v271
        %335 = vmatpush1.msra.mxu0 %v270
        %336 = vmatprep.subr.mxu0 %v273
        %337 = vmatpush1.msra.mxu0 %v272
        %338 = vmatprep.mubr.f32.mxu0 %v209
        %339 = vmatmul.mubr.f32.gmra.mrb[0].mxu0 %v208
        %v340 = vpop.f32.mrb[0].mxu0
        %v341 = vadd.f32 0.0, %v340
        %v342 = vpop.f32.mrb[0].mxu0
        %v343 = vadd.f32 0.0, %v342
        %344 = vdwg.mxu0
        %v345 = vadd.f32 %v202, %v341
        %v346 = vadd.f32 %v203, %v343
        %347 = vst [vmem:[%s191] sm:$0xff] %v345
        %348 = vst [vmem:[%s191 + $0x8] sm:$0xff] %v346
        %s349 = sand.u32 %s89, 1
        %s350 = scalar_lea.sflag [#allocation4], %s349
        %s351 = sand.u32 %s89, 1
        %s352 = smul.addr %s351, 16
        %s353 = scalar_lea.vmem [#allocation7], %s352
        // Predicated region
        $region41: #{tpu_custom_call.1} parent=27 // pred_check
          %p354 = pneg %p99
        $region42: #{tpu_custom_call.1} parent=27 // pred_check_branch
          %356 = sbr.rel (%p354) target = $region44
        $region43: #{tpu_custom_call.1} parent=27 // pred_region
          %s357 = smul.u32 2, %s24
          %s359 = ssub.s32 256, 256
          %360 = vsyncadd %s350, %s359
          %s361 = smul.addr %s357, 128
          %s362 = scalar_lea.hbm %s2, %s361
          %s364 = sshll.u32 %s353, 4
          %s365 = int_to_ptr.vmem [resolvable:$true] %s364
          %367 = dma.vmem_to_hbm [thread:$0]  %s365, 256, %s362, %s350
        $region44: #{tpu_custom_call.1} parent=27 // pred_fallthru
          _
      $region28: #{tpu_custom_call.1} parent=5 // pred_fallthru
        _
      %p368 = scmp.le.s32.totalorder 2, %s15
      // Predicated region
      $region45: #{tpu_custom_call.1} parent=5 // pred_check
        %p369 = pneg %p368
      $region46: #{tpu_custom_call.1} parent=5 // pred_check_branch
        %371 = sbr.rel (%p369) target = $region48
      $region47: #{tpu_custom_call.1} parent=5 // pred_region
        %s372 = ssub.s32 %s15, 2
        // Predicated region
        $region49: #{tpu_custom_call.1} parent=47 // pred_check
          %p373 = pneg %p105
        $region50: #{tpu_custom_call.1} parent=47 // pred_check_branch
          %375 = sbr.rel (%p373) target = $region52
        $region51: #{tpu_custom_call.1} parent=47 // pred_region
          %s376 = sand.u32 %s90, 1
          %s377 = scalar_lea.sflag [#allocation4], %s376
          %s378 = sand.u32 %s90, 1
          %s379 = smul.addr %s378, 16
          %s380 = scalar_lea.vmem [#allocation7], %s379
          %381 = dma.done %s377, 256
        $region52: #{tpu_custom_call.1} parent=47 // pred_fallthru
          _
      $region48: #{tpu_custom_call.1} parent=5 // pred_fallthru
        _
    $region6: #{tpu_custom_call.1} parent=1 // loop_footer
      %s19 = sadd.s32 1, %s15
    $region7: #{tpu_custom_call.1} parent=1 // loop_footer_branch
      %14 = sbr.rel target = $region3
    $region8: #{tpu_custom_call.1} parent=1 // loop_exit
      _
    %382 = vsyncpa [#allocation3], 1
    %s383 = scalar_lea.sflag [#allocation3], 1
    %384 = vsyncpa %s383, 1
    %385 = vsyncpa [#allocation6], 1
    %s386 = scalar_lea.sflag [#allocation6], 1
    %387 = vsyncpa %s386, 1
    %388 = vsyncpa [#allocation4], 1
    %s389 = scalar_lea.sflag [#allocation4], 1
    %390 = vsyncpa %s389, 1

</llo_original>
